<compile_context>
chip_gen: v5e
topology: v5e:2x2
jax: 0.10.0
libtpu: 0.0.40
codegen_flags: <defaults>
</compile_context>

<pallas_src>
import numpy as np
import jax
import jax.numpy as jnp
from jax.experimental import pallas as pl
from jax.experimental.pallas import tpu as pltpu

# ---- synthetic problem sizes (small, consistent with the module) ----
NUM_DATASETS = 2
NUM_SENTENCES = 4          # sentences per dataset
MAX_SEQ = 8                # padded sequence length of cached CWR embeddings
HIDDEN = 32                # CWR hidden size
BATCH = 2                  # number of (sentence_id, dataset_id) pairs per forward

_LANE = 128                # TPU lane width (last-dim granularity)


def _round_up(x, m):
    return (x + m - 1) // m * m


def build_packed_cache(cache, lengths):
    """One-time, cache-build-time layout prep (hoisted out of forward).

    * zeroes positions past each sentence's true length (the kernel's unmasked sum
      relies on this; enforcing it here removes the silent-wrong-answer hazard),
    * packs `pack = 128 // hidden` consecutive seq rows into one 128-lane row
      (pure reshape) so each gathered entry is a lane-dense slab with no 4x padding,
    * casts to f32.

    Returns (packed_cache f32[n_entries, rows_packed, lane_w], pack).
    """
    n_entries, max_seq, hidden = cache.shape
    mask = (jnp.arange(max_seq, dtype=jnp.int32)[None, :]
            < lengths.astype(jnp.int32)[:, None])
    cache = cache.astype(jnp.float32) * mask[:, :, None].astype(jnp.float32)

    pack = _LANE // hidden if _LANE % hidden == 0 else 1
    if pack & (pack - 1):          # lane-fold path needs a power-of-two pack factor
        pack = 1

    if pack > 1:
        seq_pad = _round_up(max_seq, pack)
        cache = jnp.pad(cache, ((0, 0), (0, seq_pad - max_seq), (0, 0)))
        packed = cache.reshape(n_entries, seq_pad // pack, pack * hidden)
    else:
        lane_w = _round_up(hidden, _LANE)
        packed = jnp.pad(cache, ((0, 0), (0, 0), (0, lane_w - hidden)))
    return packed, pack


def sentence_embedder_forward(sentence_ids, dataset_ids, packed_cache, lengths, *,
                              pack, hidden, num_sentences=NUM_SENTENCES):
    """Pallas equivalent of SentenceEmbedder.forward (mode='avg').

    sentence_ids : int32[batch]
    dataset_ids  : int32[batch]
    packed_cache : f32[n_entries, rows_packed, lane_w]   (from build_packed_cache)
    lengths      : int32[n_entries]
    returns      : f32[batch, hidden]
    """
    n_entries, rows_packed, lane_w = packed_cache.shape
    batch = int(sentence_ids.shape[0])

    # Host-side O(batch) scalar prep: flat entry id per pair and its exact 1/len.
    # Clamps silently remap bad ids / zero lengths (PyTorch would raise) — no Inf/NaN,
    # no OOB SMEM or DMA indices inside the kernel.
    flat = dataset_ids.astype(jnp.int32) * num_sentences + sentence_ids.astype(jnp.int32)
    flat = jnp.clip(flat, 0, n_entries - 1)
    lens = jnp.maximum(jnp.take(lengths.astype(jnp.int32), flat), 1)
    inv_len = 1.0 / lens.astype(jnp.float32)        # exact reciprocal, precomputed

    # Lane-group fold schedule: after summing sublanes, `pack` groups of `hidden`
    # lanes are folded together so lanes [0, hidden) hold the full token sum.
    n_folds = pack.bit_length() - 1                 # log2(pack); 0 when pack == 1
    fold_shifts = tuple(lane_w >> (k + 1) for k in range(n_folds))

    def kernel(flat_ref, invlen_ref, entry_ref, out_ref):
        # flat_ref   : SMEM int32[batch]   (drives the gather index_map)
        # invlen_ref : SMEM f32[batch]     (host-precomputed exact 1/len)
        # entry_ref  : VMEM f32[1, rows_packed, lane_w]  (one gathered cache entry)
        # out_ref    : VMEM f32[1, 1, lane_w]
        b = pl.program_id(0)
        # Cache is zero-padded past the true length (enforced at build time), so a
        # plain sublane sum == masked sum.
        row = jnp.sum(entry_ref[0], axis=0, keepdims=True)        # (1, lane_w)
        # Fold packed lane groups on the XLU (idle here); lanes [0, hidden) -> total.
        for s in fold_shifts:
            row = row + pltpu.roll(row, shift=s, axis=1)
        out_ref[0] = row * invlen_ref[b]            # lane-dense (1, 128) row store

    grid_spec = pltpu.PrefetchScalarGridSpec(
        num_scalar_prefetch=2,          # flat entry ids + 1/len -> SMEM
        grid=(batch,),                  # one gathered entry per step; parallel on v7x
        in_specs=[
            # Scalar-prefetch-driven gather: only the needed entries leave HBM.
            pl.BlockSpec((1, rows_packed, lane_w),
                         lambda b, flat_ref, invlen_ref: (flat_ref[b], 0, 0)),
        ],
        out_specs=pl.BlockSpec((1, 1, lane_w),
                               lambda b, flat_ref, invlen_ref: (b, 0, 0)),
    )

    out = pl.pallas_call(
        kernel,
        out_shape=jax.ShapeDtypeStruct((batch, 1, lane_w), jnp.float32),
        grid_spec=grid_spec,
        compiler_params=pltpu.CompilerParams(
            # Batch steps are independent -> shard across v7x's 2 TensorCores;
            # no-op on v5e/v6e (1 TC/chip).
            dimension_semantics=("parallel",),
        ),
    )(flat, inv_len, packed_cache)

    return out[:, 0, :hidden]


def _reference(sentence_ids, dataset_ids, cache, lengths):
    outs = []
    for sid, did in zip(np.asarray(sentence_ids), np.asarray(dataset_ids)):
        f = int(did) * NUM_SENTENCES + int(sid)
        L = int(lengths[f])
        emb = np.asarray(cache, dtype=np.float32)[f, :L]      # (L, HIDDEN)
        outs.append(emb.sum(axis=0) / L)                      # sum(dim=0) / len(...)
    return np.stack(outs, axis=0)


if __name__ == "__main__":
    key = jax.random.PRNGKey(0)
    k_cache, k_len, k_sid, k_did = jax.random.split(key, 4)

    n_entries = NUM_DATASETS * NUM_SENTENCES
    # Synthetic CWR cache; padding positions intentionally left non-zero so the test
    # exercises build_packed_cache's masking (stands in for CachedTextFieldEmbedder).
    cache = jax.random.normal(k_cache, (n_entries, MAX_SEQ, HIDDEN), dtype=jnp.float32)
    lengths = jax.random.randint(k_len, (n_entries,), 1, MAX_SEQ + 1, dtype=jnp.int32)
    sentence_ids = jax.random.randint(k_sid, (BATCH,), 0, NUM_SENTENCES, dtype=jnp.int32)
    dataset_ids = jax.random.randint(k_did, (BATCH,), 0, NUM_DATASETS, dtype=jnp.int32)

    # Cache-build time (CachedTextFieldEmbedder path): run ONCE, not per forward.
    # TODO(synk): the CWR model / cache construction itself (build_index, the text
    # field embedder) has no Pallas equivalent here; a precomputed cache stands in.
    packed_cache, pack = build_packed_cache(cache, lengths)
    packed_cache = jax.block_until_ready(packed_cache)

    out = sentence_embedder_forward(sentence_ids, dataset_ids, packed_cache, lengths,
                                    pack=pack, hidden=HIDDEN)
    out = jax.block_until_ready(out)

    ref = _reference(sentence_ids, dataset_ids, cache, lengths)
    np.testing.assert_allclose(np.asarray(out), ref, rtol=1e-5, atol=1e-5)

    print("KERNEL_OK")
</pallas_src>

<mosaic_0001>
module attributes {stable_mosaic.version = 11 : i64} {
  func.func @kernel(%arg0: i32, %arg1: memref<2xi32, #tpu.memory_space<smem>>, %arg2: memref<2xf32, #tpu.memory_space<smem>>, %arg3: memref<1x2x128xf32, #tpu.memory_space<vmem>>, %arg4: memref<1x1x128xf32, #tpu.memory_space<vmem>>) attributes {dimension_semantics = [#tpu.dimension_semantics<parallel>], iteration_bounds = array<i64: 2>, scalar_prefetch = 2 : i64, scratch_operands = 0 : i64, tpu.core_type = #tpu.core_type<tc>, window_params = [{transform_indices = @transform_0, window_bounds = array<i64: 1, 2, 128>}, {transform_indices = @transform_1, window_bounds = array<i64: 1, 1, 128>}]} {
    %c0 = arith.constant 0 : index
    %c0_0 = arith.constant 0 : index
    %c0_1 = arith.constant 0 : index
    %0 = vector.load %arg3[%c0, %c0_0, %c0_1] : memref<1x2x128xf32, #tpu.memory_space<vmem>>, vector<1x2x128xf32>
    %1 = vector.shape_cast %0 : vector<1x2x128xf32> to vector<2x128xf32>
    %cst = arith.constant dense<0.000000e+00> : vector<128xf32>
    %2 = vector.multi_reduction <add>, %1, %cst [0] : vector<2x128xf32> to vector<128xf32>
    %3 = vector.shape_cast %2 : vector<128xf32> to vector<1x128xf32>
    %c64_i32 = arith.constant 64 : i32
    %4 = tpu.dynamic_rotate %3 by %c64_i32 dim 1 : vector<1x128xf32>, i32 -> vector<1x128xf32>
    %5 = arith.addf %3, %4 : vector<1x128xf32>
    %c32_i32 = arith.constant 32 : i32
    %6 = tpu.dynamic_rotate %5 by %c32_i32 dim 1 : vector<1x128xf32>, i32 -> vector<1x128xf32>
    %7 = arith.addf %5, %6 : vector<1x128xf32>
    %8 = arith.index_cast %arg0 : i32 to index
    %9 = memref.load %arg2[%8] : memref<2xf32, #tpu.memory_space<smem>>
    %10 = vector.broadcast %9 : f32 to vector<1x128xf32>
    %11 = arith.mulf %7, %10 : vector<1x128xf32>
    %c0_2 = arith.constant 0 : index
    %c0_3 = arith.constant 0 : index
    %c0_4 = arith.constant 0 : index
    %12 = vector.load %arg4[%c0_2, %c0_3, %c0_4] : memref<1x1x128xf32, #tpu.memory_space<vmem>>, vector<1x1x128xf32>
    %13 = vector.shape_cast %12 : vector<1x1x128xf32> to vector<1x128xf32>
    %14 = vector.shape_cast %11 : vector<1x128xf32> to vector<1x1x128xf32>
    tpu.vector_store %arg4[%c0_2, %c0_3, %c0_4], %14 {strides = array<i32>} : memref<1x1x128xf32, #tpu.memory_space<vmem>>, vector<1x1x128xf32>,
    return
  }
  func.func @transform_0(%arg0: i32, %arg1: memref<2xi32, #tpu.memory_space<smem>>, %arg2: memref<2xf32, #tpu.memory_space<smem>>) -> (i32, i32, i32) {
    %0 = arith.index_cast %arg0 : i32 to index
    %1 = memref.load %arg1[%0] : memref<2xi32, #tpu.memory_space<smem>>
    %c0_i32 = arith.constant 0 : i32
    %c0_i32_0 = arith.constant 0 : i32
    %c0_i32_1 = arith.constant 0 : i32
    return %1, %c0_i32, %c0_i32_0 : i32, i32, i32
  }
  func.func @transform_1(%arg0: i32, %arg1: memref<2xi32, #tpu.memory_space<smem>>, %arg2: memref<2xf32, #tpu.memory_space<smem>>) -> (i32, i32, i32) {
    %c0_i32 = arith.constant 0 : i32
    %c0_i32_0 = arith.constant 0 : i32
    %c0_i32_1 = arith.constant 0 : i32
    return %arg0, %c0_i32, %c0_i32_0 : i32, i32, i32
  }
}

</mosaic_0001>

<llo_original>
// kernel: tpu_custom_call.1
$region0: #{tpu_custom_call.1}
  #allocation0 [shape = 'u32[]', space=smem, size = 0x4, offset = 0x4, fixed_abs, tag = 'smem constant byte address 0x4 - core index']
  #allocation1 [shape = 'u32[72,128]{1,0:T(1,128)}', space=vmem, size = 0x9000, scoped, tag = 'internal scratch']
  #allocation2 [shape = 's32[1]{0}', space=sflag, size = 0x4, scoped, tag = 'scoped memory for tpu_custom_call.1']
  #allocation3 [shape = 'u8[512]{0}', space=smem, size = 0x200, scoped, tag = 'prefetched SMEM operand 0']
  #allocation4 [shape = 'u8[512]{0}', space=smem, size = 0x200, scoped, tag = 'prefetched SMEM operand 1']
  %s0 = inlined_call_operand.hbm [shape: s32[2], index: 0, kind: input, shape index: {}]
  %s1 = inlined_call_operand.hbm [shape: f32[2], index: 1, kind: input, shape index: {}]
  %s2 = inlined_call_operand.hbm [shape: f32[8,2,128], index: 2, kind: input, shape index: {}]
  %s3 = inlined_call_operand.hbm [shape: f32[2,1,128], index: 3, kind: output, shape index: {}]
  %s4 = sld [smem:[#allocation0]]
  $region41: #{tpu_custom_call.1} parent=0
    _
  %s6 = ssub.s32 1, %s4
  %s7 = scalar_select 0, %s6, %s4
  %s9 = sshll.u32 %s0, 4
  %s10 = int_to_ptr.hbm [resolvable:$true] %s9
  %12 = dma.hbm_to_smem %s10, 16, [#allocation3], [#allocation2]
  %s14 = sshll.u32 %s1, 4
  %s15 = int_to_ptr.hbm [resolvable:$true] %s14
  %17 = dma.hbm_to_smem %s15, 16, [#allocation4], [#allocation2]
  %19 = dma.done [#allocation2], 32
  %20 = sfence
  $region1: #{tpu_custom_call.1} parent=0
    #allocation5 [shape = 'u8[2048]{0}', space=vmem, size = 0x800, scoped, tag = 'input window, operand 2']
    #allocation6 [shape = 's32[2]{0}', space=sflag, size = 0x8, scoped, tag = 'scoped memory for tpu_custom_call.1']
    #allocation7 [shape = 's32[2]{0}', space=sflag, size = 0x8, scoped, tag = 'scoped memory for tpu_custom_call.1']
    #allocation8 [shape = 'u8[1024]{0}', space=vmem, size = 0x400, scoped, tag = 'output window, operand 0']
    %21 = vsyncpa [#allocation6], 0
    %s22 = scalar_lea.sflag [#allocation6], 1
    %23 = vsyncpa %s22, 0
    %24 = vsyncpa [#allocation7], 0
    %s25 = scalar_lea.sflag [#allocation7], 1
    %26 = vsyncpa %s25, 0
    loop: start=0, step=1, limit=4
    $region2: #{tpu_custom_call.1} parent=1 // loop_pre_header
      _
    $region3: #{tpu_custom_call.1} parent=1 // loop_header
      %s28 = sphi 0, %s32
      %p29 = scmp.ge.s32.totalorder %s28, 4
      %s40 = sphi 0, %s42
      %s43 = sphi 0, %s40
      %s44 = sphi 0, %s43
      %s60 = sphi 0, %s44
      %s66 = sphi 0, %s68
      %s69 = sphi 0, %s66
      %s70 = sphi 0, %s69
      %s86 = sphi 0, %s70
    $region4: #{tpu_custom_call.1} parent=1 // loop_header_branch
      %31 = sbr.rel (%p29) target = $region8
    $region5: #{tpu_custom_call.1} parent=1 // loop_body
      %s33 = ssub.s32 %s28, 1
      %s34 = ssub.s32 %s28, 2
      %s35 = sadd.s32 %s28, 1
      %s36 = sld [smem:[#allocation3 + %s28]]
      %s37 = sld [smem:[#allocation3 + %s35]]
      %s38 = ssub.s32 %s36, %s37
      %p39 = scmp.eq.s32.totalorder %s38, 0
      %s41 = sadd.s32 %s40, 1
      %s42 = scalar_select %p39, %s40, %s41
      %p45 = pneg %p39
      %p46 = scmp.eq.s32.totalorder %s28, 1
      %p47 = por %p45, %p46
      %p48 = scmp.ne.s32.totalorder %s40, %s43
      %p49 = scmp.eq.s32.totalorder %s28, 0
      %p50 = por %p48, %p49
      %p51 = scmp.ne.s32.totalorder %s40, %s43
      %p52 = scmp.eq.s32.totalorder %s33, 1
      %p53 = por %p51, %p52
      %p54 = scmp.ne.s32.totalorder %s43, %s44
      %p55 = scmp.eq.s32.totalorder %s33, 0
      %p56 = por %p54, %p55
      %p57 = scmp.ne.s32.totalorder %s43, %s44
      %p58 = scmp.eq.s32.totalorder %s34, 1
      %p59 = por %p57, %p58
      %p61 = scmp.ne.s32.totalorder %s44, %s60
      %p62 = scmp.eq.s32.totalorder %s34, 0
      %p63 = por %p61, %p62
      %s64 = ssub.s32 %s28, %s35
      %p65 = scmp.eq.s32.totalorder %s64, 0
      %s67 = sadd.s32 %s66, 1
      %s68 = scalar_select %p65, %s66, %s67
      %p71 = pneg %p65
      %p72 = scmp.eq.s32.totalorder %s28, 1
      %p73 = por %p71, %p72
      %p74 = scmp.ne.s32.totalorder %s66, %s69
      %p75 = scmp.eq.s32.totalorder %s28, 0
      %p76 = por %p74, %p75
      %p77 = scmp.ne.s32.totalorder %s66, %s69
      %p78 = scmp.eq.s32.totalorder %s33, 1
      %p79 = por %p77, %p78
      %p80 = scmp.ne.s32.totalorder %s69, %s70
      %p81 = scmp.eq.s32.totalorder %s33, 0
      %p82 = por %p80, %p81
      %p83 = scmp.ne.s32.totalorder %s69, %s70
      %p84 = scmp.eq.s32.totalorder %s34, 1
      %p85 = por %p83, %p84
      %p87 = scmp.ne.s32.totalorder %s70, %s86
      %p88 = scmp.eq.s32.totalorder %s34, 0
      %p89 = por %p87, %p88
      %p90 = scmp.le.s32.totalorder 1, %s28
      %p91 = scmp.lt.s32.totalorder %s28, 3
      %p92 = pnand %p90, %p91
      %p93 = pneg %p92
      // Predicated region
      $region9: #{tpu_custom_call.1} parent=5 // pred_check
        _
      $region10: #{tpu_custom_call.1} parent=5 // pred_check_branch
        %95 = sbr.rel (%p92) target = $region12
      $region11: #{tpu_custom_call.1} parent=5 // pred_region
        %s96 = ssub.s32 %s28, 1
      $region12: #{tpu_custom_call.1} parent=5 // pred_fallthru
        _
      %p97 = scmp.lt.s32.totalorder %s28, 2
      // Predicated region
      $region13: #{tpu_custom_call.1} parent=5 // pred_check
        %p98 = pneg %p97
      $region14: #{tpu_custom_call.1} parent=5 // pred_check_branch
        %100 = sbr.rel (%p98) target = $region16
      $region15: #{tpu_custom_call.1} parent=5 // pred_region
        // Predicated region
        $region17: #{tpu_custom_call.1} parent=15 // pred_check
          %p101 = pneg %p50
        $region18: #{tpu_custom_call.1} parent=15 // pred_check_branch
          %103 = sbr.rel (%p101) target = $region20
        $region19: #{tpu_custom_call.1} parent=15 // pred_region
          %s104 = sand.u32 %s40, 1
          %s105 = scalar_lea.sflag [#allocation6], %s104
          %s106 = sand.u32 %s40, 1
          %s107 = smul.addr %s106, 2
          %s108 = scalar_lea.vmem [#allocation5], %s107
          %s109 = sld [smem:[#allocation3 + %s28]]
          %111 = vsyncadd %s105, 0
          %s112 = smul.addr %s109, 2
          %s113 = scalar_lea.hbm %s2, %s112
          %s115 = sshll.u32 %s113, 4
          %s116 = int_to_ptr.hbm [resolvable:$true] %s115
          %s117 = sshll.u32 %s108, 4
          %s118 = int_to_ptr.vmem [resolvable:$true] %s117
          %120 = dma.hbm_to_vmem [thread:$0]  %s116, 32, %s118, %s105
        $region20: #{tpu_custom_call.1} parent=15 // pred_fallthru
          _
      $region16: #{tpu_custom_call.1} parent=5 // pred_fallthru
        _
      %p121 = scmp.le.s32.totalorder 1, %s28
      %p122 = scmp.lt.s32.totalorder %s28, 3
      %p123 = pnand %p121, %p122
      %p124 = pneg %p123
      // Predicated region
      $region21: #{tpu_custom_call.1} parent=5 // pred_check
        _
      $region22: #{tpu_custom_call.1} parent=5 // pred_check_branch
        %126 = sbr.rel (%p123) target = $region24
      $region23: #{tpu_custom_call.1} parent=5 // pred_region
        %s127 = ssub.s32 %s28, 1
        %s128 = sand.u32 %s43, 1
        %s129 = scalar_lea.sflag [#allocation6], %s128
        %s130 = sand.u32 %s43, 1
        %s131 = smul.addr %s130, 2
        %s132 = scalar_lea.vmem [#allocation5], %s131
        // Predicated region
        $region25: #{tpu_custom_call.1} parent=23 // pred_check
          %p133 = pneg %p56
        $region26: #{tpu_custom_call.1} parent=23 // pred_check_branch
          %135 = sbr.rel (%p133) target = $region28
        $region27: #{tpu_custom_call.1} parent=23 // pred_region
          %137 = dma.done %s129, 32
        $region28: #{tpu_custom_call.1} parent=23 // pred_fallthru
          _
        %s138 = sand.u32 %s43, 1
        %s139 = scalar_lea.sflag [#allocation6], %s138
        %s140 = sand.u32 %s43, 1
        %s141 = smul.addr %s140, 2
        %s142 = scalar_lea.vmem [#allocation5], %s141
        %p143 = pneg %p56
        %p144 = pneg %p53
        %p145 = pneg %p82
        %p146 = pneg %p79
        %s147 = sand.u32 %s69, 1
        %s148 = scalar_lea.sflag [#allocation7], %s147
        %s149 = sand.u32 %s69, 1
        %s150 = scalar_lea.vmem [#allocation8], %s149
        %s151 = sld [smem:[#allocation3 + %s33]]
        %v152 = vld [vmem:[%s132] sm:$0x3]
        %vm153 = vcmask 1041408
        %v154 = vsel %vm153, %v152, 0.0
        %v155 = vrot.slane %v154, 4
        %v156 = vadd.f32 %v154, %v155
        %v157 = vrot.slane %v156, 2
        %v158 = vadd.f32 %v156, %v157
        %v159 = vrot.slane %v158, 1
        %v160 = vadd.f32 %v158, %v159
        %161 = vrot.lane.b32.xlu0 %v160, 64
        %v162 = vpop.permute.xlu0 %161
        %v163 = vadd.f32 %v160, %v162
        %164 = vrot.lane.b32.xlu0 %v163, 32
        %v165 = vpop.permute.xlu0 %164
        %v166 = vadd.f32 %v163, %v165
        %s167 = sld [smem:[#allocation4 + %s33]]
        %v168 = vstv %s167
        %v169 = vmul.f32 %v166, %v168
        %170 = vst [vmem:[%s150] sm:$0x1] %v169
        %s171 = sand.u32 %s69, 1
        %s172 = scalar_lea.sflag [#allocation7], %s171
        %s173 = sand.u32 %s69, 1
        %s174 = scalar_lea.vmem [#allocation8], %s173
        // Predicated region
        $region29: #{tpu_custom_call.1} parent=23 // pred_check
          %p175 = pneg %p79
        $region30: #{tpu_custom_call.1} parent=23 // pred_check_branch
          %177 = sbr.rel (%p175) target = $region32
        $region31: #{tpu_custom_call.1} parent=23 // pred_region
          %179 = vsyncadd %s172, 0
          %s180 = scalar_lea.hbm %s3, %s33
          %s182 = sshll.u32 %s174, 4
          %s183 = int_to_ptr.vmem [resolvable:$true] %s182
          %s184 = sshll.u32 %s180, 4
          %s185 = int_to_ptr.hbm [resolvable:$true] %s184
          %187 = dma.vmem_to_hbm [thread:$0]  %s183, 16, %s185, %s172
        $region32: #{tpu_custom_call.1} parent=23 // pred_fallthru
          _
      $region24: #{tpu_custom_call.1} parent=5 // pred_fallthru
        _
      %p188 = scmp.le.s32.totalorder 2, %s28
      // Predicated region
      $region33: #{tpu_custom_call.1} parent=5 // pred_check
        %p189 = pneg %p188
      $region34: #{tpu_custom_call.1} parent=5 // pred_check_branch
        %191 = sbr.rel (%p189) target = $region36
      $region35: #{tpu_custom_call.1} parent=5 // pred_region
        %s192 = ssub.s32 %s28, 2
        // Predicated region
        $region37: #{tpu_custom_call.1} parent=35 // pred_check
          %p193 = pneg %p85
        $region38: #{tpu_custom_call.1} parent=35 // pred_check_branch
          %195 = sbr.rel (%p193) target = $region40
        $region39: #{tpu_custom_call.1} parent=35 // pred_region
          %s196 = sand.u32 %s70, 1
          %s197 = scalar_lea.sflag [#allocation7], %s196
          %s198 = sand.u32 %s70, 1
          %s199 = scalar_lea.vmem [#allocation8], %s198
          %201 = dma.done %s197, 16
        $region40: #{tpu_custom_call.1} parent=35 // pred_fallthru
          _
      $region36: #{tpu_custom_call.1} parent=5 // pred_fallthru
        _
    $region6: #{tpu_custom_call.1} parent=1 // loop_footer
      %s32 = sadd.s32 1, %s28
    $region7: #{tpu_custom_call.1} parent=1 // loop_footer_branch
      %27 = sbr.rel target = $region3
    $region8: #{tpu_custom_call.1} parent=1 // loop_exit
      _
    %202 = vsyncpa [#allocation6], 1
    %s203 = scalar_lea.sflag [#allocation6], 1
    %204 = vsyncpa %s203, 1
    %205 = vsyncpa [#allocation7], 1
    %s206 = scalar_lea.sflag [#allocation7], 1
    %207 = vsyncpa %s206, 1

</llo_original>
